<compile_context>
chip_gen: v6e
topology: v6e:2x2x1
jax: 0.10.0
libtpu: 0.0.40
codegen_flags: <defaults>
</compile_context>

<pallas_src>
import jax
import jax.numpy as jnp
from jax.experimental import pallas as pl
from jax.experimental.pallas import tpu as pltpu

VOCAB_SIZE = 400000
PAD_ID = 1234  # synthetic stand-in for glove_dict['_']; wire the real index in prod.


def _glove_tokenizer_kernel(len_ref, raw_ref, ids_ref, mask_ref):
    """Native [B, L] layout: batch rows on sublanes, token position on lanes.

    len_ref : [TB, 1] int32  -- per-sentence real-token counts
    raw_ref : [TB, L] int32  -- host dict-lookup results, OOV marked negative
    ids_ref : [TB, L] int32  -- OOV -> PAD_ID, right-padded with PAD_ID
    mask_ref: [TB, L] int8   -- 0 for real tokens, 1 for padding
    """
    pos = jax.lax.broadcasted_iota(jnp.int32, raw_ref.shape, 1)   # [TB, L]
    valid = pos < len_ref[...]                                    # [TB,1] bcast -> [TB,L]
    raw = raw_ref[...]
    # Single fused select: in-range AND in-vocab -> keep id, else '_' id.
    ids_ref[...] = jnp.where(valid & (raw >= 0), raw, PAD_ID)
    # 0 for real tokens, 1 for padding (matches the PyTorch reference polarity).
    mask_ref[...] = (~valid).astype(jnp.int8)


def _pick_tile(B, L):
    """Choose (tb, grid_b, B_padded) for the batch (sublane) axis."""
    # Per-step double-buffered VMEM bytes per batch row: raw i32 + ids i32
    # + mask i8 + lengths i32 column, each double-buffered.
    bytes_per_row = 2 * (L * (4 + 4 + 1) + 4)
    budget = 6 * 1024 * 1024          # well under v5e's 16 MiB scoped VMEM default
    cap = min(8192, max(8, (budget // bytes_per_row) // 8 * 8))
    b8 = ((B + 7) // 8) * 8           # minimal sublane padding
    grid_b = max(1, -(-b8 // cap))
    # Keep >= 2 parallel blocks on big batches so v7x's two TensorCores both stream.
    if grid_b == 1 and b8 >= 2048:
        grid_b = 2
    tb = ((-(-b8 // grid_b) + 7) // 8) * 8
    return tb, grid_b, grid_b * tb


def glove_tokenize_pad(raw_ids, lengths):
    """raw_ids: [B, L] int32 (L == max sentence length; OOV words marked < 0)
       lengths: [B]    int32 (number of real tokens per sentence, <= L)
       returns (input_ids [B, L] int32, masks [B, L] int8)."""
    B, L = raw_ids.shape
    tb, grid_b, Bp = _pick_tile(B, L)

    raw = raw_ids.astype(jnp.int32)
    len_col = lengths.astype(jnp.int32).reshape(B, 1)
    if Bp != B:
        # Pad rows get length 0 -> pure padding output; sliced off below.
        raw = jnp.pad(raw, ((0, Bp - B), (0, 0)))
        len_col = jnp.pad(len_col, ((0, Bp - B), (0, 0)))

    ids, mask = pl.pallas_call(
        _glove_tokenizer_kernel,
        out_shape=(
            jax.ShapeDtypeStruct((Bp, L), jnp.int32),
            jax.ShapeDtypeStruct((Bp, L), jnp.int8),
        ),
        grid=(grid_b,),
        in_specs=[
            pl.BlockSpec((tb, 1), lambda i: (i, 0)),   # lengths column
            pl.BlockSpec((tb, L), lambda i: (i, 0)),   # raw ids
        ],
        out_specs=(
            pl.BlockSpec((tb, L), lambda i: (i, 0)),
            pl.BlockSpec((tb, L), lambda i: (i, 0)),
        ),
        compiler_params=pltpu.CompilerParams(
            dimension_semantics=("parallel",)),
    )(len_col, raw)

    if Bp != B:
        ids, mask = ids[:B], mask[:B]
    return ids, mask


def _reference(raw_ids, lengths):
    """Pure-JAX reference of the numeric semantics (for validation)."""
    B, L = raw_ids.shape
    pos = jnp.arange(L, dtype=jnp.int32)[None, :]
    valid = pos < lengths[:, None]
    ids = jnp.where(valid & (raw_ids >= 0), raw_ids, PAD_ID).astype(jnp.int32)
    mask = (~valid).astype(jnp.int8)
    return ids, mask


def _check(raw_ids, lengths):
    ids, mask = glove_tokenize_pad(raw_ids, lengths)
    jax.block_until_ready((ids, mask))
    ref_ids, ref_mask = _reference(raw_ids, lengths)
    assert ids.shape == raw_ids.shape and mask.shape == raw_ids.shape
    assert ids.dtype == jnp.int32 and mask.dtype == jnp.int8
    assert bool(jnp.all(ids == ref_ids))
    assert bool(jnp.all(mask == ref_mask))


def _make_case(key, B, L):
    k_len, k_ids, k_oov = jax.random.split(key, 3)
    lengths = jax.random.randint(k_len, (B,), 1, L + 1, dtype=jnp.int32)
    raw = jax.random.randint(k_ids, (B, L), 0, VOCAB_SIZE, dtype=jnp.int32)
    raw = jnp.where(jax.random.bernoulli(k_oov, 0.2, (B, L)), jnp.int32(-1), raw)
    return raw, lengths


if __name__ == "__main__":
    key = jax.random.PRNGKey(0)
    k1, k2, k3, k4 = jax.random.split(key, 4)

    # Case 1: tiny spec-sized batch: B=8, L=16 -> single 8-row block.
    L = 16
    lengths1 = jnp.array([3, 7, 16, 5, 9, 12, 1, 16], dtype=jnp.int32)
    raw1, _ = _make_case(k1, 8, L)
    _check(raw1, lengths1)

    # Case 2: moderate batch, single block path: B=256.
    raw2, len2 = _make_case(k2, 256, L)
    _check(raw2, len2)

    # Case 3: non-multiple-of-8 batch -> sublane padding path: B=13.
    raw3, len3 = _make_case(k3, 13, L)
    _check(raw3, len3)

    # Case 4: larger batch -> 2 parallel grid blocks (+ padding): B=4100.
    raw4, len4 = _make_case(k4, 4100, L)
    _check(raw4, len4)

    print("KERNEL_OK")
</pallas_src>

<mosaic_0001>
module attributes {stable_mosaic.version = 11 : i64} {
  func.func @_glove_tokenizer_kernel(%arg0: i32, %arg1: memref<8x1xi32, #tpu.memory_space<vmem>>, %arg2: memref<8x16xi32, #tpu.memory_space<vmem>>, %arg3: memref<8x16xi32, #tpu.memory_space<vmem>>, %arg4: memref<8x16xi8, #tpu.memory_space<vmem>>) attributes {dimension_semantics = [#tpu.dimension_semantics<parallel>], iteration_bounds = array<i64: 1>, scalar_prefetch = 0 : i64, scratch_operands = 0 : i64, tpu.core_type = #tpu.core_type<tc>, window_params = [{transform_indices = @transform_0, window_bounds = array<i64: 8, 1>}, {transform_indices = @transform_1, window_bounds = array<i64: 8, 16>}, {transform_indices = @transform_2, window_bounds = array<i64: 8, 16>}, {transform_indices = @transform_3, window_bounds = array<i64: 8, 16>}]} {
    %0 = tpu.iota {dimensions = array<i32: 1>} : vector<8x16xi32>
    %c0 = arith.constant 0 : index
    %c0_0 = arith.constant 0 : index
    %1 = vector.load %arg1[%c0, %c0_0] : memref<8x1xi32, #tpu.memory_space<vmem>>, vector<8x1xi32>
    %2 = vector.broadcast %1 : vector<8x1xi32> to vector<8x16xi32>
    %3 = arith.cmpi slt, %0, %2 : vector<8x16xi32>
    %c0_1 = arith.constant 0 : index
    %c0_2 = arith.constant 0 : index
    %4 = vector.load %arg2[%c0_1, %c0_2] : memref<8x16xi32, #tpu.memory_space<vmem>>, vector<8x16xi32>
    %c0_i32 = arith.constant 0 : i32
    %5 = vector.broadcast %c0_i32 : i32 to vector<8x16xi32>
    %6 = arith.cmpi sge, %4, %5 : vector<8x16xi32>
    %7 = arith.andi %3, %6 : vector<8x16xi1>
    %c1234_i32 = arith.constant 1234 : i32
    %8 = vector.broadcast %c1234_i32 : i32 to vector<8x16xi32>
    %9 = arith.select %7, %4, %8 : vector<8x16xi1>, vector<8x16xi32>
    %c0_3 = arith.constant 0 : index
    %c0_4 = arith.constant 0 : index
    %10 = vector.load %arg3[%c0_3, %c0_4] : memref<8x16xi32, #tpu.memory_space<vmem>>, vector<8x16xi32>
    tpu.vector_store %arg3[%c0_3, %c0_4], %9 {strides = array<i32>} : memref<8x16xi32, #tpu.memory_space<vmem>>, vector<8x16xi32>,
    %cst = arith.constant dense<true> : vector<8x16xi1>
    %11 = arith.xori %3, %cst : vector<8x16xi1>
    %12 = arith.extui %11 : vector<8x16xi1> to vector<8x16xi8>
    %c0_5 = arith.constant 0 : index
    %c0_6 = arith.constant 0 : index
    %13 = vector.load %arg4[%c0_5, %c0_6] : memref<8x16xi8, #tpu.memory_space<vmem>>, vector<8x16xi8>
    tpu.vector_store %arg4[%c0_5, %c0_6], %12 {strides = array<i32>} : memref<8x16xi8, #tpu.memory_space<vmem>>, vector<8x16xi8>,
    return
  }
  func.func @transform_0(%arg0: i32) -> (i32, i32) {
    %c0_i32 = arith.constant 0 : i32
    %c0_i32_0 = arith.constant 0 : i32
    return %arg0, %c0_i32 : i32, i32
  }
  func.func @transform_1(%arg0: i32) -> (i32, i32) {
    %c0_i32 = arith.constant 0 : i32
    %c0_i32_0 = arith.constant 0 : i32
    return %arg0, %c0_i32 : i32, i32
  }
  func.func @transform_2(%arg0: i32) -> (i32, i32) {
    %c0_i32 = arith.constant 0 : i32
    %c0_i32_0 = arith.constant 0 : i32
    return %arg0, %c0_i32 : i32, i32
  }
  func.func @transform_3(%arg0: i32) -> (i32, i32) {
    %c0_i32 = arith.constant 0 : i32
    %c0_i32_0 = arith.constant 0 : i32
    return %arg0, %c0_i32 : i32, i32
  }
}

</mosaic_0001>

<llo_original>
// kernel: tpu_custom_call.1
$region0: #{tpu_custom_call.1}
  #allocation0 [shape = 'u32[]', space=smem, size = 0x4, offset = 0x4, fixed_abs, tag = 'smem constant byte address 0x4 - core index']
  #allocation1 [shape = 'u32[144,128]{1,0:T(1,128)}', space=vmem, size = 0x12000, scoped, tag = 'internal scratch']
  %s0 = inlined_call_operand.vmem [shape: s32[8,1], index: 0, kind: input, shape index: {}]
  %s1 = inlined_call_operand.vmem [shape: s32[8,16], index: 1, kind: input, shape index: {}]
  %s2 = inlined_call_operand.hbm [shape: s32[8,16], index: 2, kind: output, shape index: {0}]
  %s3 = inlined_call_operand.hbm [shape: s8[8,16], index: 3, kind: output, shape index: {1}]
  %4 = xla_tuple %s2, %s3
  %s5 = sld [smem:[#allocation0]]
  $region26: #{tpu_custom_call.1} parent=0
    _
  %s7 = ssub.s32 1, %s5
  %s8 = scalar_select 0, %s7, %s5
  $region1: #{tpu_custom_call.1} parent=0
    #allocation2 [shape = 'u8[4096]{0}', space=vmem, size = 0x1000, scoped, tag = 'output window, operand 0, single buffered']
    #allocation3 [shape = 's32[1]{0}', space=sflag, size = 0x4, scoped, tag = 'scoped memory for tpu_custom_call.1']
    #allocation4 [shape = 'u8[1024]{0}', space=vmem, size = 0x400, scoped, tag = 'output window, operand 1, single buffered']
    #allocation5 [shape = 's32[1]{0}', space=sflag, size = 0x4, scoped, tag = 'scoped memory for tpu_custom_call.1']
    %9 = vsyncpa [#allocation3], 0
    %10 = vsyncpa [#allocation5], 0
    // Predicated region
    $region2: #{tpu_custom_call.1} parent=1 // pred_check
      _
    $region3: #{tpu_custom_call.1} parent=1 // pred_check_branch
      %12 = sbr.rel (0) target = $region5
    $region4: #{tpu_custom_call.1} parent=1 // pred_region
      _
    $region5: #{tpu_custom_call.1} parent=1 // pred_fallthru
      _
    // Predicated region
    $region6: #{tpu_custom_call.1} parent=1 // pred_check
      _
    $region7: #{tpu_custom_call.1} parent=1 // pred_check_branch
      %14 = sbr.rel (0) target = $region9
    $region8: #{tpu_custom_call.1} parent=1 // pred_region
      _
    $region9: #{tpu_custom_call.1} parent=1 // pred_fallthru
      _
    %v17 = vlaneseq
    %v18 = vand.u32 %v17, 127
    %v19 = vld [vmem:[%s0] sm:$0xff]
    %20 = vset.pattern.permute.xlu0 0
    %21 = vperm.xlu0 %20, %v19
    %v22 = vpop.permute.xlu0 %21
    %vm23 = vcmp.lt.s32.totalorder %v18, %v22
    %v24 = vld [vmem:[%s1] sm:$0xff]
    %vm25 = vcmp.ge.s32.totalorder %v24, 0
    %vm26 = vmand %vm23, %vm25
    %v27 = vsel %vm26, %v24, 1234
    %vm28 = vcmask 130048
    %29 = vst.msk [vmem:[#allocation2] sm:$0xff] %vm28, %v27
    %vm30 = vmxor %vm23, 1
    %vm31 = vmpackc.low %vm30, %vm30
    %vm32 = vmpackc.even %vm31, %vm31
    %v33 = vsel %vm32, 16843009, 0
    %vm34 = vcmask 123904
    %35 = vst.msk [vmem:[#allocation4] sm:$0x3] %vm34, %v33
    // Predicated region
    $region10: #{tpu_custom_call.1} parent=1 // pred_check
      _
    $region11: #{tpu_custom_call.1} parent=1 // pred_check_branch
      %37 = sbr.rel (0) target = $region13
    $region12: #{tpu_custom_call.1} parent=1 // pred_region
      %s39 = ssub.s32 128, 128
      %40 = vsyncadd [#allocation3], %s39
      %s42 = sshll.u32 [#allocation2], 4
      %s43 = int_to_ptr.vmem [resolvable:$true] %s42
      %45 = dma.vmem_to_hbm [thread:$0]  %s43, 128, %s2, [#allocation3]
    $region13: #{tpu_custom_call.1} parent=1 // pred_fallthru
      _
    // Predicated region
    $region14: #{tpu_custom_call.1} parent=1 // pred_check
      _
    $region15: #{tpu_custom_call.1} parent=1 // pred_check_branch
      %47 = sbr.rel (0) target = $region17
    $region16: #{tpu_custom_call.1} parent=1 // pred_region
      %s49 = ssub.s32 32, 32
      %50 = vsyncadd [#allocation5], %s49
      %s52 = sshll.u32 [#allocation4], 4
      %s53 = int_to_ptr.vmem [resolvable:$true] %s52
      %55 = dma.vmem_to_hbm [thread:$0]  %s53, 32, %s3, [#allocation5]
    $region17: #{tpu_custom_call.1} parent=1 // pred_fallthru
      _
    // Predicated region
    $region18: #{tpu_custom_call.1} parent=1 // pred_check
      _
    $region19: #{tpu_custom_call.1} parent=1 // pred_check_branch
      %57 = sbr.rel (0) target = $region21
    $region20: #{tpu_custom_call.1} parent=1 // pred_region
      %58 = dma.done [#allocation3], 128
    $region21: #{tpu_custom_call.1} parent=1 // pred_fallthru
      _
    // Predicated region
    $region22: #{tpu_custom_call.1} parent=1 // pred_check
      _
    $region23: #{tpu_custom_call.1} parent=1 // pred_check_branch
      %60 = sbr.rel (0) target = $region25
    $region24: #{tpu_custom_call.1} parent=1 // pred_region
      %61 = dma.done [#allocation5], 32
    $region25: #{tpu_custom_call.1} parent=1 // pred_fallthru
      _
    %62 = vsyncpa [#allocation3], 1
    %63 = vsyncpa [#allocation5], 1

</llo_original>
